<compile_context>
chip_gen: v7x
topology: tpu7x:2x2x1
jax: 0.10.0
libtpu: 0.0.40
codegen_flags: <defaults>
</compile_context>

<pallas_src>
import jax
import jax.numpy as jnp
from jax import lax
from jax.experimental import pallas as pl
from jax.experimental.pallas import tpu as pltpu


def _round_up(n, m):
    return ((n + m - 1) // m) * m


# ---------------- Path A: weight fully VMEM-resident, 1-D grid over M ----------

def _wresident_kernel(x_ref, w_ref, o_ref):
    # x_ref: (tm, Fin)   activation tile               (VMEM, compute dtype)
    # w_ref: (Fout, Fin) full weight, PyTorch layout   (VMEM, constant block)
    # o_ref: (tm, Fout)  output tile
    # Contract dim 1 of x with dim 1 of W == x @ W.T, natively on the MXU
    # (transposed RHS), f32 accumulation.
    o_ref[...] = lax.dot_general(
        x_ref[...],
        w_ref[...],
        dimension_numbers=(((1,), (1,)), ((), ())),
        preferred_element_type=jnp.float32,
    ).astype(o_ref.dtype)


# ---------------- Path B: generic 3-D tiled matmul with f32 accumulator --------

def _tiled_kernel(x_ref, w_ref, o_ref, acc_ref):
    @pl.when(pl.program_id(2) == 0)
    def _init():
        acc_ref[...] = jnp.zeros_like(acc_ref)

    acc_ref[...] += lax.dot_general(
        x_ref[...],
        w_ref[...],
        dimension_numbers=(((1,), (1,)), ((), ())),
        preferred_element_type=jnp.float32,
    )

    @pl.when(pl.program_id(2) == pl.num_programs(2) - 1)
    def _finalize():
        o_ref[...] = acc_ref[...].astype(o_ref.dtype)


def predictor_block_forward(x, w_predictor, *, compute_dtype=jnp.bfloat16,
                            tm_max=512, tn_max=512):
    """PredictorBlock.forward: x @ w_predictor.T on the last axis.

    x:           (B, S, in_features)
    w_predictor: (out_features, in_features)   (PyTorch nn.Linear layout)
    returns:     (B, S, out_features), dtype of x.
    """
    B, S, Fin = x.shape
    Fout, Fin_w = w_predictor.shape
    assert Fin_w == Fin, "weight in_features mismatch"

    out_dtype = x.dtype
    M = B * S
    x2d = x.reshape(M, Fin).astype(compute_dtype)
    w = w_predictor.astype(compute_dtype)

    c_item = jnp.dtype(compute_dtype).itemsize
    o_item = jnp.dtype(out_dtype).itemsize
    sub = 16 if c_item == 2 else 8           # sublane packing unit (bf16: 16)

    VMEM_BUDGET = 48 * 1024 * 1024           # v7x-safe (64 MiB physical)
    w_bytes = Fout * Fin * c_item

    # ------------------------ Path A: weight resident -------------------------
    if w_bytes <= 16 * 1024 * 1024:
        # Pick tm:  * full M when small (block == full dim, no padding),
        #           * split in two when cleanly possible (>=2 parallel tiles
        #             so v7x's two TensorCores both get work),
        #           * cap at tm_max for big M.
        if M > tm_max:
            tm = tm_max
        elif M >= 2 * sub and M % (2 * sub) == 0:
            tm = M // 2
        else:
            tm = M

        # Per-step VMEM footprint: W (counted x2, conservative for the
        # pipeline's buffer pair) + double-buffered x tiles + double-buffered
        # output tiles.  Shrink tm if it overshoots the budget.
        def _footprint(t):
            return 2 * w_bytes + 2 * t * Fin * c_item + 2 * t * Fout * o_item

        while tm > sub and _footprint(tm) > VMEM_BUDGET:
            tm = max(sub, _round_up(tm // 2, sub))

        if _footprint(tm) <= VMEM_BUDGET:
            Mp = _round_up(M, tm)
            if Mp != M:
                # Only the M axis is ever padded here (K/N blocks are full-dim).
                x2d = jnp.pad(x2d, ((0, Mp - M), (0, 0)))

            grid = (Mp // tm,)
            flops = 2 * Mp * Fin * Fout
            bytes_accessed = (Mp * Fin + Fout * Fin) * c_item + Mp * Fout * o_item
            vmem_limit = int(min(max(_footprint(tm) + (4 << 20), 32 << 20),
                                 56 << 20))

            out2d = pl.pallas_call(
                _wresident_kernel,
                out_shape=jax.ShapeDtypeStruct((Mp, Fout), out_dtype),
                grid_spec=pltpu.PrefetchScalarGridSpec(
                    num_scalar_prefetch=0,
                    grid=grid,
                    in_specs=[
                        pl.BlockSpec((tm, Fin), lambda i: (i, 0)),     # x tile
                        pl.BlockSpec((Fout, Fin), lambda i: (0, 0)),   # W, resident
                    ],
                    out_specs=pl.BlockSpec((tm, Fout), lambda i: (i, 0)),
                ),
                compiler_params=pltpu.CompilerParams(
                    dimension_semantics=("parallel",),
                    vmem_limit_bytes=vmem_limit,
                ),
                cost_estimate=pl.CostEstimate(
                    flops=flops, transcendentals=0,
                    bytes_accessed=bytes_accessed),
            )(x2d, w)
            return out2d[:M].reshape(B, S, Fout)

    # ------------------------ Path B: tiled fallback ---------------------------
    # Weight too large to keep resident: canonical 3-D grid, reduction last,
    # bf16 operands, f32 accumulator scratch.  Prefer the full K per grid step
    # (removes the per-step accumulator round trip) unless VMEM-tight.
    tm = min(tm_max, _round_up(M, sub))
    tn = min(tn_max, _round_up(Fout, 128))
    tk = _round_up(Fin, 128)

    def _footprint_b(tk_):
        return (2 * (tm * tk_ + tn * tk_) * c_item
                + tm * tn * 4 + 2 * tm * tn * o_item)

    while tk > 128 and _footprint_b(tk) > VMEM_BUDGET:
        tk = _round_up(tk // 2, 128)

    Mp = _round_up(M, tm)
    Np = _round_up(Fout, tn)
    Kp = _round_up(Fin, tk)

    if (Mp, Kp) != (M, Fin):
        x2d = jnp.pad(x2d, ((0, Mp - M), (0, Kp - Fin)))
    if (Np, Kp) != (Fout, Fin):
        w = jnp.pad(w, ((0, Np - Fout), (0, Kp - Fin)))

    grid = (Mp // tm, Np // tn, Kp // tk)
    flops = 2 * Mp * Kp * Np
    # Account for the re-fetch factors (x read Np/tn times, W read Mp/tm times).
    bytes_accessed = (Mp * Kp * (Np // tn) + Np * Kp * (Mp // tm)) * c_item \
                     + Mp * Np * o_item
    vmem_limit = int(min(max(_footprint_b(tk) + (4 << 20), 32 << 20), 56 << 20))

    out2d = pl.pallas_call(
        _tiled_kernel,
        out_shape=jax.ShapeDtypeStruct((Mp, Np), out_dtype),
        grid_spec=pltpu.PrefetchScalarGridSpec(
            num_scalar_prefetch=0,
            grid=grid,
            in_specs=[
                pl.BlockSpec((tm, tk), lambda i, j, k: (i, k)),   # x tile
                pl.BlockSpec((tn, tk), lambda i, j, k: (j, k)),   # W tile (Fout,Fin)
            ],
            out_specs=pl.BlockSpec((tm, tn), lambda i, j, k: (i, j)),
            scratch_shapes=[pltpu.VMEM((tm, tn), jnp.float32)],
        ),
        compiler_params=pltpu.CompilerParams(
            dimension_semantics=("parallel", "parallel", "arbitrary"),
            vmem_limit_bytes=vmem_limit,
        ),
        cost_estimate=pl.CostEstimate(
            flops=flops, transcendentals=0, bytes_accessed=bytes_accessed),
    )(x2d, w)

    return out2d[:M, :Fout].reshape(B, S, Fout)


if __name__ == "__main__":
    key = jax.random.PRNGKey(0)
    k_x, k_wp, k_w1, k_b1 = jax.random.split(key, 4)

    B, S = 2, 8
    in_features, out_features = 32, 64

    x = jax.random.normal(k_x, (B, S, in_features), dtype=jnp.float32)

    # Deterministic parameter init (PyTorch nn.Linear shapes).
    bound = 1.0 / (in_features ** 0.5)
    w_predictor = jax.random.uniform(
        k_wp, (out_features, in_features), minval=-bound, maxval=bound,
        dtype=jnp.float32)
    # linear_1 params exist in __init__ but are unused in forward().
    w_linear1 = jax.random.uniform(
        k_w1, (out_features, in_features), minval=-bound, maxval=bound,
        dtype=jnp.float32)
    b_linear1 = jax.random.uniform(
        k_b1, (out_features,), minval=-bound, maxval=bound, dtype=jnp.float32)

    out = predictor_block_forward(x, w_predictor)
    out = jax.block_until_ready(out)
    assert out.shape == (B, S, out_features)

    # Reference with identical numerics (bf16 operands, f32 accumulation).
    x_c = x.astype(jnp.bfloat16).astype(jnp.float32)
    w_c = w_predictor.astype(jnp.bfloat16).astype(jnp.float32)
    ref_bf16 = jnp.einsum("bsf,of->bso", x_c, w_c)
    assert jnp.allclose(out, ref_bf16, atol=1e-4, rtol=1e-4)

    # Coarse sanity check against the full-precision f32 reference.
    ref_f32 = jnp.einsum("bsf,of->bso", x, w_predictor)
    assert jnp.allclose(out, ref_f32, atol=5e-2, rtol=5e-2)

    print("KERNEL_OK")
</pallas_src>

<mosaic_0001>
module attributes {stable_mosaic.version = 11 : i64} {
  func.func @_wresident_kernel(%arg0: i32, %arg1: memref<16x32xbf16, #tpu.memory_space<vmem>>, %arg2: memref<64x32xbf16, #tpu.memory_space<vmem>>, %arg3: memref<16x64xf32, #tpu.memory_space<vmem>>) attributes {dimension_semantics = [#tpu.dimension_semantics<parallel>], iteration_bounds = array<i64: 1>, scalar_prefetch = 0 : i64, scratch_operands = 0 : i64, tpu.core_type = #tpu.core_type<tc>, window_params = [{transform_indices = @transform_0, window_bounds = array<i64: 16, 32>}, {pipeline_mode = #tpu.pipeline_mode<synchronous>, transform_indices = @transform_1, window_bounds = array<i64: 64, 32>}, {transform_indices = @transform_2, window_bounds = array<i64: 16, 64>}]} {
    %c0 = arith.constant 0 : index
    %c0_0 = arith.constant 0 : index
    %0 = vector.load %arg1[%c0, %c0_0] : memref<16x32xbf16, #tpu.memory_space<vmem>>, vector<16x32xbf16>
    %c0_1 = arith.constant 0 : index
    %c0_2 = arith.constant 0 : index
    %1 = vector.load %arg2[%c0_1, %c0_2] : memref<64x32xbf16, #tpu.memory_space<vmem>>, vector<64x32xbf16>
    %cst = arith.constant dense<0.000000e+00> : vector<16x64xf32>
    %2 = tpu.matmul %0, %1, %cst {dimension_numbers = #tpu.dot_dimension_numbers<[1], [1], [0], [0], [0, 0, 1, 0], [], []>} : vector<16x32xbf16>, vector<64x32xbf16>, vector<16x64xf32> -> vector<16x64xf32>
    %c0_3 = arith.constant 0 : index
    %c0_4 = arith.constant 0 : index
    %3 = vector.load %arg3[%c0_3, %c0_4] : memref<16x64xf32, #tpu.memory_space<vmem>>, vector<16x64xf32>
    tpu.vector_store %arg3[%c0_3, %c0_4], %2 {strides = array<i32>} : memref<16x64xf32, #tpu.memory_space<vmem>>, vector<16x64xf32>,
    return
  }
  func.func @transform_0(%arg0: i32) -> (i32, i32) {
    %c0_i32 = arith.constant 0 : i32
    %c0_i32_0 = arith.constant 0 : i32
    return %arg0, %c0_i32 : i32, i32
  }
  func.func @transform_1(%arg0: i32) -> (i32, i32) {
    %c0_i32 = arith.constant 0 : i32
    %c0_i32_0 = arith.constant 0 : i32
    %c0_i32_1 = arith.constant 0 : i32
    return %c0_i32, %c0_i32_0 : i32, i32
  }
  func.func @transform_2(%arg0: i32) -> (i32, i32) {
    %c0_i32 = arith.constant 0 : i32
    %c0_i32_0 = arith.constant 0 : i32
    return %arg0, %c0_i32 : i32, i32
  }
}

</mosaic_0001>

<llo_original>
// kernel: tpu_custom_call.1
$region0: #{tpu_custom_call.1}
  #allocation0 [shape = 'u32[]', space=smem, size = 0x4, offset = 0x4, fixed_abs, tag = 'smem constant byte address 0x4 - core index']
  #allocation1 [shape = 'u32[144,128]{1,0:T(1,128)}', space=vmem, size = 0x12000, scoped, tag = 'internal scratch']
  %s0 = inlined_call_operand.vmem [shape: bf16[16,32], index: 0, kind: input, shape index: {}]
  %s1 = inlined_call_operand.vmem [shape: bf16[64,32], index: 1, kind: input, shape index: {}]
  %s2 = inlined_call_operand.hbm [shape: f32[16,64], index: 2, kind: output, shape index: {}]
  %s3 = sld [smem:[#allocation0]]
  $region18: #{tpu_custom_call.1} parent=0
    _
  %s5 = ssub.s32 1, %s3
  %s6 = scalar_select 0, %s5, %s3
  $region1: #{tpu_custom_call.1} parent=0
    #allocation2 [shape = 'u8[8192]{0}', space=vmem, size = 0x2000, scoped, tag = 'output window, operand 0, single buffered']
    #allocation3 [shape = 's32[1]{0}', space=sflag, size = 0x4, scoped, tag = 'scoped memory for tpu_custom_call.1']
    %7 = vsyncpa [#allocation3], 0
    // Predicated region
    $region2: #{tpu_custom_call.1} parent=1 // pred_check
      _
    $region3: #{tpu_custom_call.1} parent=1 // pred_check_branch
      %9 = sbr.rel (0) target = $region5
    $region4: #{tpu_custom_call.1} parent=1 // pred_region
      _
    $region5: #{tpu_custom_call.1} parent=1 // pred_fallthru
      _
    // Predicated region
    $region6: #{tpu_custom_call.1} parent=1 // pred_check
      _
    $region7: #{tpu_custom_call.1} parent=1 // pred_check_branch
      %11 = sbr.rel (0) target = $region9
    $region8: #{tpu_custom_call.1} parent=1 // pred_region
      _
    $region9: #{tpu_custom_call.1} parent=1 // pred_fallthru
      _
    %v13 = vld [vmem:[%s0] sm:$0xf]
    %v14 = vld [vmem:[%s0 + $0x4] sm:$0xf]
    %v15 = vld [vmem:[%s1] sm:$0xf]
    %v16 = vld [vmem:[%s1 + $0x4] sm:$0xf]
    %v17 = vld [vmem:[%s1 + $0x8] sm:$0xf]
    %v18 = vld [vmem:[%s1 + $0xc] sm:$0xf]
    %v19 = vld [vmem:[%s1 + $0x10] sm:$0xf]
    %v20 = vld [vmem:[%s1 + $0x14] sm:$0xf]
    %v21 = vld [vmem:[%s1 + $0x18] sm:$0xf]
    %v22 = vld [vmem:[%s1 + $0x1c] sm:$0xf]
    %v25 = vunpack.c.l.b16 %v13
    %v26 = vunpack.c.l.b16 %v14
    %v27 = vpack.c.b16 %v26, %v25
    %v36 = vunpack.c.l.b16 %v15
    %v37 = vunpack.c.l.b16 %v16
    %v38 = vunpack.c.l.b16 %v17
    %v39 = vunpack.c.l.b16 %v18
    %v40 = vunpack.c.l.b16 %v19
    %v41 = vunpack.c.l.b16 %v20
    %v42 = vunpack.c.l.b16 %v21
    %v43 = vunpack.c.l.b16 %v22
    %v44 = vpack.c.b16 %v37, %v36
    %v45 = vpack.c.b16 %v39, %v38
    %v46 = vpack.c.b16 %v41, %v40
    %v47 = vpack.c.b16 %v43, %v42
    %vm48 = vcmask 261120
    %v50 = vsel %vm48, %v27, 0
    %v53 = vsel %vm48, %v44, 0
    %v56 = vsel %vm48, %v45, 0
    %v59 = vsel %vm48, %v46, 0
    %v62 = vsel %vm48, %v47, 0
    %64 = vmatprep.subr.bf16.mxu0 0
    %65 = vmatpush1.bf16.xpose.msra.mxu0 %v53
    %66 = vmatprep.subr.bf16.mxu0 0
    %67 = vmatpush1.bf16.xpose.msra.mxu0 %v56
    %68 = vmatprep.subr.bf16.mxu0 0
    %69 = vmatpush1.bf16.xpose.msra.mxu0 %v59
    %70 = vmatprep.subr.bf16.mxu0 0
    %71 = vmatpush1.bf16.xpose.msra.mxu0 %v62
    %72 = vmatprep.subr.bf16.mxu0 0
    %73 = vmatpush1.bf16.xpose.msra.mxu0 0
    %74 = vmatprep.subr.bf16.mxu0 0
    %75 = vmatpush1.bf16.xpose.msra.mxu0 0
    %76 = vmatprep.subr.bf16.mxu0 0
    %77 = vmatpush1.bf16.xpose.msra.mxu0 0
    %78 = vmatprep.subr.bf16.mxu0 0
    %79 = vmatpush1.bf16.xpose.msra.mxu0 0
    %80 = vmatprep.subr.bf16.mxu0 0
    %81 = vmatpush1.bf16.xpose.msra.mxu0 0
    %82 = vmatprep.subr.bf16.mxu0 0
    %83 = vmatpush1.bf16.xpose.msra.mxu0 0
    %84 = vmatprep.subr.bf16.mxu0 0
    %85 = vmatpush1.bf16.xpose.msra.mxu0 0
    %86 = vmatprep.subr.bf16.mxu0 0
    %87 = vmatpush1.bf16.xpose.msra.mxu0 0
    %88 = vmatprep.subr.bf16.mxu0 0
    %89 = vmatpush1.bf16.xpose.msra.mxu0 0
    %90 = vmatprep.subr.bf16.mxu0 0
    %91 = vmatpush1.bf16.xpose.msra.mxu0 0
    %92 = vmatprep.subr.bf16.mxu0 0
    %93 = vmatpush1.bf16.xpose.msra.mxu0 0
    %94 = vmatprep.subr.bf16.mxu0 0
    %95 = vmatpush1.bf16.xpose.msra.mxu0 0
    %96 = vmatprep.mubr.bf16.mxu0 0
    %97 = vmatmul.mubr.bf16.gmra.mrb[0].mxu0 %v50
    %v98 = vpop.f32.mrb[0].mxu0
    %v99 = vadd.f32 0.0, %v98
    %v100 = vpop.f32.mrb[0].mxu0
    %v101 = vpop.f32.mrb[0].mxu0
    %v102 = vadd.f32 0.0, %v101
    %v103 = vpop.f32.mrb[0].mxu0
    %104 = vdwg.mxu0
    %vm105 = vcmask 523264
    %106 = vst.msk [vmem:[#allocation2] sm:$0xff] %vm105, %v99
    %107 = vst.msk [vmem:[#allocation2 + $0x8] sm:$0xff] %vm105, %v102
    // Predicated region
    $region10: #{tpu_custom_call.1} parent=1 // pred_check
      _
    $region11: #{tpu_custom_call.1} parent=1 // pred_check_branch
      %109 = sbr.rel (0) target = $region13
    $region12: #{tpu_custom_call.1} parent=1 // pred_region
      %s111 = ssub.s32 256, 256
      %112 = vsyncadd [#allocation3], %s111
      %s113 = sshll.u32 [#allocation2], 4
      %s114 = int_to_ptr.vmem [resolvable:$true] %s113
      %119 = dma.vmem_to_hbm [thread:$0]  %s114, 256, %s2, [#allocation3], 128, 128, 8
    $region13: #{tpu_custom_call.1} parent=1 // pred_fallthru
      _
    // Predicated region
    $region14: #{tpu_custom_call.1} parent=1 // pred_check
      _
    $region15: #{tpu_custom_call.1} parent=1 // pred_check_branch
      %121 = sbr.rel (0) target = $region17
    $region16: #{tpu_custom_call.1} parent=1 // pred_region
      %122 = dma.done [#allocation3], 256
    $region17: #{tpu_custom_call.1} parent=1 // pred_fallthru
      _
    %123 = vsyncpa [#allocation3], 1

</llo_original>
